<compile_context>
chip_gen: v7x
topology: tpu7x:2x2x1
jax: 0.10.0
libtpu: 0.0.40
codegen_flags: <defaults>
</compile_context>

<pallas_src>
import jax
import jax.numpy as jnp
from jax.experimental import pallas as pl
from jax.experimental.pallas import tpu as pltpu

# true_A = [[-0.1, 2.0], [-2.0, -0.1]] baked as constants.
_A00, _A01 = -0.1, 2.0
_A10, _A11 = -2.0, -0.1

_TILE_N = 512  # lane-axis tile (multiple of 128)


def _lambda_kernel(yt_ref, ot_ref):
    # yt_ref: (2, T) lane-dense view of y.T   (row 0 = y[:,0], row 1 = y[:,1])
    # ot_ref: (2, T) lane-dense view of out.T
    yt = yt_ref[...].astype(jnp.float32)
    y3 = yt * yt * yt                      # elementwise cube on the VPU
    y3_0 = y3[0:1, :]
    y3_1 = y3[1:2, :]
    # out.T row r = sum_k A[k, r] * y3.T row k  (pure VPU, no MXU round-trip)
    out0 = _A00 * y3_0 + _A10 * y3_1       # column 0 of (y^3) @ A
    out1 = _A01 * y3_0 + _A11 * y3_1       # column 1 of (y^3) @ A
    ot_ref[...] = jnp.concatenate([out0, out1], axis=0).astype(ot_ref.dtype)


def lambda_forward(t, y):
    """Pallas equivalent of Lambda.forward(t, y). `t` is unused (kept for parity)."""
    del t
    n, d = y.shape
    assert d == 2, "Lambda module is defined for state dimension 2"

    yt = y.T  # (2, N): lane-dense layout, N on the 128-lane axis

    if n <= _TILE_N:
        tile = n                     # single block == full array dims (no 128 constraint)
        n_pad = n
    else:
        tile = _TILE_N
        n_pad = pl.cdiv(n, tile) * tile
        if n_pad != n:
            yt = jnp.pad(yt, ((0, 0), (0, n_pad - n)))

    out_t = pl.pallas_call(
        _lambda_kernel,
        out_shape=jax.ShapeDtypeStruct((2, n_pad), y.dtype),
        grid=(n_pad // tile,),
        in_specs=[pl.BlockSpec((2, tile), lambda i: (0, i))],
        out_specs=pl.BlockSpec((2, tile), lambda i: (0, i)),
        compiler_params=pltpu.CompilerParams(
            dimension_semantics=("parallel",)),
    )(yt)

    return out_t[:, :n].T


if __name__ == "__main__":
    true_A = jnp.array([[_A00, _A01], [_A10, _A11]], dtype=jnp.float32)
    key = jax.random.PRNGKey(0)
    t = jnp.float32(0.0)  # unused by the forward pass

    # Small example input matching the module's ODE use case: batch of 8 states of dim 2.
    y_small = jax.random.normal(key, (8, 2), dtype=jnp.float32)
    out_small = jax.block_until_ready(lambda_forward(t, y_small))
    ref_small = (y_small ** 3) @ true_A
    assert out_small.shape == (8, 2)
    assert jnp.allclose(out_small, ref_small, atol=1e-5, rtol=1e-5)

    # Larger batch to exercise the lane-dense tiled / parallel-grid path.
    y_big = jax.random.normal(jax.random.PRNGKey(1), (1200, 2), dtype=jnp.float32)
    out_big = jax.block_until_ready(lambda_forward(t, y_big))
    ref_big = (y_big ** 3) @ true_A
    assert out_big.shape == (1200, 2)
    assert jnp.allclose(out_big, ref_big, atol=1e-5, rtol=1e-5)

    print("KERNEL_OK")
</pallas_src>

<mosaic_0001>
module attributes {stable_mosaic.version = 11 : i64} {
  func.func @_lambda_kernel(%arg0: i32, %arg1: memref<2x8xf32, #tpu.memory_space<vmem>>, %arg2: memref<2x8xf32, #tpu.memory_space<vmem>>) attributes {dimension_semantics = [#tpu.dimension_semantics<parallel>], iteration_bounds = array<i64: 1>, scalar_prefetch = 0 : i64, scratch_operands = 0 : i64, tpu.core_type = #tpu.core_type<tc>, window_params = [{transform_indices = @transform_0, window_bounds = array<i64: 2, 8>}, {transform_indices = @transform_1, window_bounds = array<i64: 2, 8>}]} {
    %c0 = arith.constant 0 : index
    %c0_0 = arith.constant 0 : index
    %0 = vector.load %arg1[%c0, %c0_0] : memref<2x8xf32, #tpu.memory_space<vmem>>, vector<2x8xf32>
    %1 = arith.mulf %0, %0 : vector<2x8xf32>
    %2 = arith.mulf %1, %0 : vector<2x8xf32>
    %3 = vector.extract_strided_slice %2 {offsets = [0, 0], sizes = [1, 8], strides = [1, 1]} : vector<2x8xf32> to vector<1x8xf32>
    %4 = vector.extract_strided_slice %2 {offsets = [1, 0], sizes = [1, 8], strides = [1, 1]} : vector<2x8xf32> to vector<1x8xf32>
    %cst = arith.constant -1.000000e-01 : f32
    %5 = vector.broadcast %cst : f32 to vector<1x8xf32>
    %6 = arith.mulf %5, %3 : vector<1x8xf32>
    %cst_1 = arith.constant -2.000000e+00 : f32
    %7 = vector.broadcast %cst_1 : f32 to vector<1x8xf32>
    %8 = arith.mulf %7, %4 : vector<1x8xf32>
    %9 = arith.addf %6, %8 : vector<1x8xf32>
    %cst_2 = arith.constant 2.000000e+00 : f32
    %10 = vector.broadcast %cst_2 : f32 to vector<1x8xf32>
    %11 = arith.mulf %10, %3 : vector<1x8xf32>
    %cst_3 = arith.constant -1.000000e-01 : f32
    %12 = vector.broadcast %cst_3 : f32 to vector<1x8xf32>
    %13 = arith.mulf %12, %4 : vector<1x8xf32>
    %14 = arith.addf %11, %13 : vector<1x8xf32>
    %15 = tpu.concatenate %9, %14 in 0 : vector<1x8xf32>, vector<1x8xf32> -> vector<2x8xf32>
    %c0_4 = arith.constant 0 : index
    %c0_5 = arith.constant 0 : index
    %16 = vector.load %arg2[%c0_4, %c0_5] : memref<2x8xf32, #tpu.memory_space<vmem>>, vector<2x8xf32>
    tpu.vector_store %arg2[%c0_4, %c0_5], %15 {strides = array<i32>} : memref<2x8xf32, #tpu.memory_space<vmem>>, vector<2x8xf32>,
    return
  }
  func.func @transform_0(%arg0: i32) -> (i32, i32) {
    %c0_i32 = arith.constant 0 : i32
    %c0_i32_0 = arith.constant 0 : i32
    return %c0_i32, %arg0 : i32, i32
  }
  func.func @transform_1(%arg0: i32) -> (i32, i32) {
    %c0_i32 = arith.constant 0 : i32
    %c0_i32_0 = arith.constant 0 : i32
    return %c0_i32, %arg0 : i32, i32
  }
}

</mosaic_0001>

<llo_original>
// kernel: tpu_custom_call.1
$region0: #{tpu_custom_call.1}
  #allocation0 [shape = 'u32[]', space=smem, size = 0x4, offset = 0x4, fixed_abs, tag = 'smem constant byte address 0x4 - core index']
  #allocation1 [shape = 'u32[144,128]{1,0:T(1,128)}', space=vmem, size = 0x12000, scoped, tag = 'internal scratch']
  %s0 = inlined_call_operand.hbm [shape: f32[2,8], index: 0, kind: input, shape index: {}]
  %s1 = inlined_call_operand.hbm [shape: f32[2,8], index: 1, kind: output, shape index: {}]
  %s2 = sld [smem:[#allocation0]]
  $region18: #{tpu_custom_call.1} parent=0
    _
  %s4 = ssub.s32 1, %s2
  %s5 = scalar_select 0, %s4, %s2
  $region1: #{tpu_custom_call.1} parent=0
    #allocation2 [shape = 'u8[1024]{0}', space=vmem, size = 0x400, scoped, tag = 'input window, operand 0, single buffered']
    #allocation3 [shape = 's32[1]{0}', space=sflag, size = 0x4, scoped, tag = 'scoped memory for tpu_custom_call.1']
    #allocation4 [shape = 's32[1]{0}', space=sflag, size = 0x4, scoped, tag = 'scoped memory for tpu_custom_call.1']
    #allocation5 [shape = 'u8[1024]{0}', space=vmem, size = 0x400, scoped, tag = 'output window, operand 0, single buffered']
    %6 = vsyncpa [#allocation3], 0
    %7 = vsyncpa [#allocation4], 0
    // Predicated region
    $region2: #{tpu_custom_call.1} parent=1 // pred_check
      _
    $region3: #{tpu_custom_call.1} parent=1 // pred_check_branch
      %9 = sbr.rel (0) target = $region5
    $region4: #{tpu_custom_call.1} parent=1 // pred_region
      %s11 = ssub.s32 32, 32
      %12 = vsyncadd [#allocation3], %s11
      %s14 = sshll.u32 [#allocation2], 4
      %s15 = int_to_ptr.vmem [resolvable:$true] %s14
      %17 = dma.hbm_to_vmem [thread:$0]  %s0, 32, %s15, [#allocation3]
    $region5: #{tpu_custom_call.1} parent=1 // pred_fallthru
      _
    // Predicated region
    $region6: #{tpu_custom_call.1} parent=1 // pred_check
      _
    $region7: #{tpu_custom_call.1} parent=1 // pred_check_branch
      %19 = sbr.rel (0) target = $region9
    $region8: #{tpu_custom_call.1} parent=1 // pred_region
      %20 = dma.done [#allocation3], 32
    $region9: #{tpu_custom_call.1} parent=1 // pred_fallthru
      _
    %v21 = vld [vmem:[#allocation2] sm:$0x3]
    %v22 = vmul.f32 %v21, %v21
    %v23 = vmul.f32 %v22, %v21
    %v24 = vmul.f32 %v23, -0.1
    %v25 = vmul.f32 %v23, -2.0
    %v27 = vrot.slane %v25, 1
    %v29 = vadd.f32 %v24, %v27
    %v30 = vmul.f32 %v23, 2.0
    %v32 = vrot.slane %v24, 1
    %v34 = vadd.f32 %v30, %v32
    %v36 = vrot.slane %v34, 7
    %vm38 = vcmask 1040384
    %v39 = vsel %vm38, %v29, %v36
    %vm40 = vcmask 58368
    %41 = vst.msk [vmem:[#allocation5] sm:$0x3] %vm40, %v39
    // Predicated region
    $region10: #{tpu_custom_call.1} parent=1 // pred_check
      _
    $region11: #{tpu_custom_call.1} parent=1 // pred_check_branch
      %43 = sbr.rel (0) target = $region13
    $region12: #{tpu_custom_call.1} parent=1 // pred_region
      %s45 = ssub.s32 32, 32
      %46 = vsyncadd [#allocation4], %s45
      %s48 = sshll.u32 [#allocation5], 4
      %s49 = int_to_ptr.vmem [resolvable:$true] %s48
      %51 = dma.vmem_to_hbm [thread:$0]  %s49, 32, %s1, [#allocation4]
    $region13: #{tpu_custom_call.1} parent=1 // pred_fallthru
      _
    // Predicated region
    $region14: #{tpu_custom_call.1} parent=1 // pred_check
      _
    $region15: #{tpu_custom_call.1} parent=1 // pred_check_branch
      %53 = sbr.rel (0) target = $region17
    $region16: #{tpu_custom_call.1} parent=1 // pred_region
      %54 = dma.done [#allocation4], 32
    $region17: #{tpu_custom_call.1} parent=1 // pred_fallthru
      _
    %55 = vsyncpa [#allocation3], 1
    %56 = vsyncpa [#allocation4], 1

</llo_original>
